<compile_context>
chip_gen: v5e
topology: v5e:2x2
jax: 0.10.0
libtpu: 0.0.40
codegen_flags: <defaults>
</compile_context>

<pallas_src>
import jax
import jax.numpy as jnp
from jax.experimental import pallas as pl
from jax.experimental.pallas import tpu as pltpu

IN_FEATURES = 8        # scenario != 3 branch of the module
HIDDEN = 256 * 4       # 1024
N_ACTIONS = 9
PAD_K = 128            # lane-dense padded input-feature dim (8 -> 128) for the MXU
PAD_N = 128            # lane-dense padded action dim (9 -> 128)
NEG_BIG = -1e30        # effectively -inf: exp underflows to exactly 0 in f32


def actor_kernel(x_ref, w1_ref, b1_ref, w2_ref, b2_ref, probs_ref):
    # ---- Layer 1: Linear(8 -> 1024) on the MXU (K zero-padded 8 -> 128).
    # bf16 operands, f32 accumulation; zero K-rows of w1 contribute nothing.
    x = x_ref[...].astype(jnp.bfloat16)                                 # (TB, 128)
    h = jnp.dot(x, w1_ref[...], preferred_element_type=jnp.float32)     # (TB, H) f32
    h = jnp.maximum(h + b1_ref[...], 0.0)                               # bias + ReLU

    # ---- Layer 2: Linear(1024 -> 9), lane-dense padded to 128 outputs (MXU).
    logits = jnp.dot(h.astype(jnp.bfloat16), w2_ref[...],
                     preferred_element_type=jnp.float32)                # (TB, 128)
    logits = logits + b2_ref[...]

    # Mask padded lanes (>= N_ACTIONS) so they contribute nothing to softmax.
    lane = jax.lax.broadcasted_iota(jnp.int32, logits.shape, 1)
    logits = jnp.where(lane < N_ACTIONS, logits, NEG_BIG)

    # ---- Softmax(dim=-1): numerically stable; EXACT normalization so each row
    # sums to 1 (approx reciprocal previously broke the sum-to-1 invariant).
    m = jnp.max(logits, axis=-1, keepdims=True)
    e = jnp.exp(logits - m)
    denom = jnp.sum(e, axis=-1, keepdims=True)
    probs_ref[...] = e * pl.reciprocal(denom)       # padded lanes stay exactly 0


def _round_up(x, m):
    return ((x + m - 1) // m) * m


def _choose_batch_tile(B, max_tile):
    # Enough grid steps that (a) tiles fit max_tile and (b) the 'parallel' grid
    # axis has >= 2 steps once the batch is non-trivial (v7x megacore), while
    # keeping the tile near ceil(B / n_tiles) to minimize batch padding.
    n_tiles = max(1, pl.cdiv(B, max_tile))
    if B >= 16:
        n_tiles = max(n_tiles, 2)
    return min(max_tile, _round_up(pl.cdiv(B, n_tiles), 8))


def actor_forward_padded(state, w1_padded, b1, w2_padded, b2_padded, *, max_tile=1024):
    """state: (B, 8) f32 -> padded action probabilities (b_pad, 128) f32.

    Padded action lanes (>= 9) are exactly 0 and padded batch rows (>= B) are
    garbage, so a downstream Categorical sampler can consume rows [:B] of this
    tensor directly without paying for the [:B, :9] slice copy.
    """
    B = state.shape[0]
    tb = _choose_batch_tile(B, max_tile)
    b_pad = _round_up(B, tb)
    grid = (b_pad // tb,)

    # Zero-pad batch to the tile multiple and features 8 -> 128 so layer 1 is a
    # clean lane-dense MXU contraction.
    x = jnp.pad(state, ((0, b_pad - B), (0, PAD_K - IN_FEATURES)))

    cost = pl.CostEstimate(
        flops=2 * b_pad * (PAD_K * HIDDEN + HIDDEN * PAD_N),
        transcendentals=b_pad * PAD_N,
        bytes_accessed=(x.size * 4 + w1_padded.size * 2 + b1.size * 4
                        + w2_padded.size * 2 + b2_padded.size * 4
                        + b_pad * PAD_N * 4),
    )

    return pl.pallas_call(
        actor_kernel,
        out_shape=jax.ShapeDtypeStruct((b_pad, PAD_N), jnp.float32),
        grid=grid,
        in_specs=[
            pl.BlockSpec((tb, PAD_K), lambda i: (i, 0)),        # state tile (f32)
            pl.BlockSpec((PAD_K, HIDDEN), lambda i: (0, 0)),    # w1 (bf16, resident)
            pl.BlockSpec((1, HIDDEN), lambda i: (0, 0)),        # b1 (f32)
            pl.BlockSpec((HIDDEN, PAD_N), lambda i: (0, 0)),    # w2 (bf16, resident)
            pl.BlockSpec((1, PAD_N), lambda i: (0, 0)),         # b2 (f32)
        ],
        out_specs=pl.BlockSpec((tb, PAD_N), lambda i: (i, 0)),  # lane-dense out
        compiler_params=pltpu.CompilerParams(
            dimension_semantics=("parallel",),
            vmem_limit_bytes=32 * 1024 * 1024),                 # v5e-safe headroom
        cost_estimate=cost,
    )(x, w1_padded, b1, w2_padded, b2_padded)


def actor_forward(state, w1_padded, b1, w2_padded, b2_padded, *, max_tile=1024):
    """Convenience wrapper returning the exact (B, 9) probability tensor."""
    probs_padded = actor_forward_padded(state, w1_padded, b1, w2_padded, b2_padded,
                                        max_tile=max_tile)
    return probs_padded[:state.shape[0], :N_ACTIONS]


def init_params(key):
    """Deterministic synthetic init (PyTorch-Linear-like uniform fan-in bounds)."""
    k1, k2, k3, k4 = jax.random.split(key, 4)
    bound1 = 1.0 / jnp.sqrt(IN_FEATURES)
    bound2 = 1.0 / jnp.sqrt(HIDDEN)
    # Stored transposed relative to torch (in, out) so the kernel does x @ W.
    w1 = jax.random.uniform(k1, (IN_FEATURES, HIDDEN), jnp.float32, -bound1, bound1)
    b1 = jax.random.uniform(k2, (1, HIDDEN), jnp.float32, -bound1, bound1)
    w2 = jax.random.uniform(k3, (HIDDEN, N_ACTIONS), jnp.float32, -bound2, bound2)
    b2 = jax.random.uniform(k4, (1, N_ACTIONS), jnp.float32, -bound2, bound2)

    # One-time host-side repack to MXU-friendly, lane-dense bf16 blocks:
    #   w1: (8, 1024)  -> (128, 1024) bf16, zero rows  8..127 (padded K)
    #   w2: (1024, 9)  -> (1024, 128) bf16, zero cols  9..127 (padded N)
    w1_padded = jnp.zeros((PAD_K, HIDDEN), jnp.float32).at[:IN_FEATURES, :].set(w1)
    w1_padded = w1_padded.astype(jnp.bfloat16)
    w2_padded = jnp.zeros((HIDDEN, PAD_N), jnp.float32).at[:, :N_ACTIONS].set(w2)
    w2_padded = w2_padded.astype(jnp.bfloat16)
    b2_padded = jnp.zeros((1, PAD_N), jnp.float32).at[:, :N_ACTIONS].set(b2)
    return (w1_padded, b1, w2_padded, b2_padded), (w1, b1, w2, b2)


if __name__ == "__main__":
    key = jax.random.PRNGKey(0)
    key_x, key_p = jax.random.split(key)

    B = 8
    state = jax.random.normal(key_x, (B, IN_FEATURES), dtype=jnp.float32)
    (w1p, b1, w2p, b2p), (w1, _, w2, b2) = init_params(key_p)

    probs_padded = actor_forward_padded(state, w1p, b1, w2p, b2p)
    probs_padded = jax.block_until_ready(probs_padded)
    probs = probs_padded[:B, :N_ACTIONS]

    # Pure-JAX f32 reference of the same forward pass (Linear->ReLU->Linear->Softmax).
    h_ref = jnp.maximum(state @ w1 + b1, 0.0)
    logits_ref = h_ref @ w2 + b2
    probs_ref = jax.nn.softmax(logits_ref, axis=-1)

    assert probs.shape == (B, N_ACTIONS)
    # Padded action lanes are exactly zero -> Categorical-safe without slicing.
    assert bool(jnp.all(probs_padded[:B, N_ACTIONS:] == 0.0))
    # Exact normalization: every row sums to 1 to f32 precision.
    assert jnp.allclose(jnp.sum(probs, axis=-1), 1.0, atol=1e-4)
    # bf16 MXU operands vs the pure-f32 reference.
    assert jnp.allclose(probs, probs_ref, atol=2e-2, rtol=2e-2)

    # TODO(synk): Categorical(probs) sampling / log_prob is distribution-object
    # glue, not kernel compute; the kernel returns the probability tensor it wraps.
    print("KERNEL_OK")
</pallas_src>

<mosaic_0001>
module attributes {stable_mosaic.version = 11 : i64} {
  func.func @actor_kernel(%arg0: i32, %arg1: memref<8x128xf32, #tpu.memory_space<vmem>>, %arg2: memref<128x1024xbf16, #tpu.memory_space<vmem>>, %arg3: memref<1x1024xf32, #tpu.memory_space<vmem>>, %arg4: memref<1024x128xbf16, #tpu.memory_space<vmem>>, %arg5: memref<1x128xf32, #tpu.memory_space<vmem>>, %arg6: memref<8x128xf32, #tpu.memory_space<vmem>>) attributes {dimension_semantics = [#tpu.dimension_semantics<parallel>], iteration_bounds = array<i64: 1>, scalar_prefetch = 0 : i64, scratch_operands = 0 : i64, tpu.core_type = #tpu.core_type<tc>, window_params = [{transform_indices = @transform_0, window_bounds = array<i64: 8, 128>}, {pipeline_mode = #tpu.pipeline_mode<synchronous>, transform_indices = @transform_1, window_bounds = array<i64: 128, 1024>}, {pipeline_mode = #tpu.pipeline_mode<synchronous>, transform_indices = @transform_2, window_bounds = array<i64: 1, 1024>}, {pipeline_mode = #tpu.pipeline_mode<synchronous>, transform_indices = @transform_3, window_bounds = array<i64: 1024, 128>}, {pipeline_mode = #tpu.pipeline_mode<synchronous>, transform_indices = @transform_4, window_bounds = array<i64: 1, 128>}, {transform_indices = @transform_5, window_bounds = array<i64: 8, 128>}]} {
    %c0 = arith.constant 0 : index
    %c0_0 = arith.constant 0 : index
    %0 = vector.load %arg1[%c0, %c0_0] : memref<8x128xf32, #tpu.memory_space<vmem>>, vector<8x128xf32>
    %1 = arith.truncf %0 : vector<8x128xf32> to vector<8x128xbf16>
    %c0_1 = arith.constant 0 : index
    %c0_2 = arith.constant 0 : index
    %2 = vector.load %arg2[%c0_1, %c0_2] : memref<128x1024xbf16, #tpu.memory_space<vmem>>, vector<128x1024xbf16>
    %cst = arith.constant dense<0.000000e+00> : vector<8x1024xf32>
    %3 = tpu.matmul %1, %2, %cst {dimension_numbers = #tpu.dot_dimension_numbers<[1], [0], [0], [1], [0, 0, 1, 1], [], []>} : vector<8x128xbf16>, vector<128x1024xbf16>, vector<8x1024xf32> -> vector<8x1024xf32>
    %c0_3 = arith.constant 0 : index
    %c0_4 = arith.constant 0 : index
    %4 = vector.load %arg3[%c0_3, %c0_4] : memref<1x1024xf32, #tpu.memory_space<vmem>>, vector<1x1024xf32>
    %5 = vector.broadcast %4 : vector<1x1024xf32> to vector<8x1024xf32>
    %6 = arith.addf %3, %5 : vector<8x1024xf32>
    %cst_5 = arith.constant 0.000000e+00 : f32
    %7 = vector.broadcast %cst_5 : f32 to vector<8x1024xf32>
    %8 = arith.maximumf %6, %7 : vector<8x1024xf32>
    %9 = arith.truncf %8 : vector<8x1024xf32> to vector<8x1024xbf16>
    %c0_6 = arith.constant 0 : index
    %c0_7 = arith.constant 0 : index
    %10 = vector.load %arg4[%c0_6, %c0_7] : memref<1024x128xbf16, #tpu.memory_space<vmem>>, vector<1024x128xbf16>
    %cst_8 = arith.constant dense<0.000000e+00> : vector<8x128xf32>
    %11 = tpu.matmul %9, %10, %cst_8 {dimension_numbers = #tpu.dot_dimension_numbers<[1], [0], [0], [1], [0, 0, 1, 1], [], []>} : vector<8x1024xbf16>, vector<1024x128xbf16>, vector<8x128xf32> -> vector<8x128xf32>
    %c0_9 = arith.constant 0 : index
    %c0_10 = arith.constant 0 : index
    %12 = vector.load %arg5[%c0_9, %c0_10] : memref<1x128xf32, #tpu.memory_space<vmem>>, vector<1x128xf32>
    %13 = vector.broadcast %12 : vector<1x128xf32> to vector<8x128xf32>
    %14 = arith.addf %11, %13 : vector<8x128xf32>
    %15 = tpu.iota {dimensions = array<i32: 1>} : vector<8x128xi32>
    %c9_i32 = arith.constant 9 : i32
    %16 = vector.broadcast %c9_i32 : i32 to vector<8x128xi32>
    %17 = arith.cmpi slt, %15, %16 : vector<8x128xi32>
    %cst_11 = arith.constant -1.000000e+30 : f32
    %18 = vector.broadcast %cst_11 : f32 to vector<8x128xf32>
    %19 = arith.select %17, %14, %18 : vector<8x128xi1>, vector<8x128xf32>
    %cst_12 = arith.constant dense<0xFF800000> : vector<8xf32>
    %20 = vector.multi_reduction <maximumf>, %19, %cst_12 [1] : vector<8x128xf32> to vector<8xf32>
    %21 = vector.shape_cast %20 : vector<8xf32> to vector<8x1xf32>
    %22 = vector.broadcast %21 : vector<8x1xf32> to vector<8x128xf32>
    %23 = arith.subf %19, %22 : vector<8x128xf32>
    %24 = math.exp %23 : vector<8x128xf32>
    %cst_13 = arith.constant dense<0.000000e+00> : vector<8xf32>
    %25 = vector.multi_reduction <add>, %24, %cst_13 [1] : vector<8x128xf32> to vector<8xf32>
    %26 = vector.shape_cast %25 : vector<8xf32> to vector<8x1xf32>
    %27 = tpu.reciprocal %26 : vector<8x1xf32> -> vector<8x1xf32>
    %28 = vector.broadcast %27 : vector<8x1xf32> to vector<8x128xf32>
    %29 = arith.mulf %24, %28 : vector<8x128xf32>
    %c0_14 = arith.constant 0 : index
    %c0_15 = arith.constant 0 : index
    %30 = vector.load %arg6[%c0_14, %c0_15] : memref<8x128xf32, #tpu.memory_space<vmem>>, vector<8x128xf32>
    tpu.vector_store %arg6[%c0_14, %c0_15], %29 {strides = array<i32>} : memref<8x128xf32, #tpu.memory_space<vmem>>, vector<8x128xf32>,
    return
  }
  func.func @transform_0(%arg0: i32) -> (i32, i32) {
    %c0_i32 = arith.constant 0 : i32
    %c0_i32_0 = arith.constant 0 : i32
    return %arg0, %c0_i32 : i32, i32
  }
  func.func @transform_1(%arg0: i32) -> (i32, i32) {
    %c0_i32 = arith.constant 0 : i32
    %c0_i32_0 = arith.constant 0 : i32
    %c0_i32_1 = arith.constant 0 : i32
    return %c0_i32, %c0_i32_0 : i32, i32
  }
  func.func @transform_2(%arg0: i32) -> (i32, i32) {
    %c0_i32 = arith.constant 0 : i32
    %c0_i32_0 = arith.constant 0 : i32
    %c0_i32_1 = arith.constant 0 : i32
    return %c0_i32, %c0_i32_0 : i32, i32
  }
  func.func @transform_3(%arg0: i32) -> (i32, i32) {
    %c0_i32 = arith.constant 0 : i32
    %c0_i32_0 = arith.constant 0 : i32
    %c0_i32_1 = arith.constant 0 : i32
    return %c0_i32, %c0_i32_0 : i32, i32
  }
  func.func @transform_4(%arg0: i32) -> (i32, i32) {
    %c0_i32 = arith.constant 0 : i32
    %c0_i32_0 = arith.constant 0 : i32
    %c0_i32_1 = arith.constant 0 : i32
    return %c0_i32, %c0_i32_0 : i32, i32
  }
  func.func @transform_5(%arg0: i32) -> (i32, i32) {
    %c0_i32 = arith.constant 0 : i32
    %c0_i32_0 = arith.constant 0 : i32
    return %arg0, %c0_i32 : i32, i32
  }
}

</mosaic_0001>

<llo_original>
// kernel: tpu_custom_call.1
$region0: #{tpu_custom_call.1}
  #allocation0 [shape = 'u32[]', space=smem, size = 0x4, offset = 0x4, fixed_abs, tag = 'smem constant byte address 0x4 - core index']
  #allocation1 [shape = 'u32[72,128]{1,0:T(1,128)}', space=vmem, size = 0x9000, scoped, tag = 'internal scratch']
  %s0 = inlined_call_operand.hbm [shape: f32[8,128], index: 0, kind: input, shape index: {}]
  %s1 = inlined_call_operand.hbm [shape: bf16[128,1024], index: 1, kind: input, shape index: {}]
  %s2 = inlined_call_operand.hbm [shape: f32[1,1024], index: 2, kind: input, shape index: {}]
  %s3 = inlined_call_operand.hbm [shape: bf16[1024,128], index: 3, kind: input, shape index: {}]
  %s4 = inlined_call_operand.vmem [shape: f32[1,128], index: 4, kind: input, shape index: {}]
  %s5 = inlined_call_operand.hbm [shape: f32[8,128], index: 5, kind: output, shape index: {}]
  %s6 = sld [smem:[#allocation0]]
  $region46: #{tpu_custom_call.1} parent=0
    _
  %s8 = ssub.s32 1, %s6
  %s9 = scalar_select 0, %s8, %s6
  $region1: #{tpu_custom_call.1} parent=0
    #allocation2 [shape = 'u8[4096]{0}', space=vmem, size = 0x1000, scoped, tag = 'input window, operand 0, single buffered']
    #allocation3 [shape = 's32[1]{0}', space=sflag, size = 0x4, scoped, tag = 'scoped memory for tpu_custom_call.1']
    #allocation4 [shape = 's32[1]{0}', space=sflag, size = 0x4, scoped, tag = 'scoped memory for tpu_custom_call.1']
    #allocation5 [shape = 'u8[262144]{0}', space=vmem, size = 0x40000, scoped, tag = 'input window, operand 1, single buffered']
    #allocation6 [shape = 's32[1]{0}', space=sflag, size = 0x4, scoped, tag = 'scoped memory for tpu_custom_call.1']
    #allocation7 [shape = 'u8[4096]{0}', space=vmem, size = 0x1000, scoped, tag = 'input window, operand 2, single buffered']
    #allocation8 [shape = 'u8[262144]{0}', space=vmem, size = 0x40000, scoped, tag = 'input window, operand 3, single buffered']
    #allocation9 [shape = 's32[1]{0}', space=sflag, size = 0x4, scoped, tag = 'scoped memory for tpu_custom_call.1']
    #allocation10 [shape = 'u8[4096]{0}', space=vmem, size = 0x1000, scoped, tag = 'output window, operand 0, single buffered']
    %10 = vsyncpa [#allocation3], 0
    %11 = vsyncpa [#allocation6], 0
    %12 = vsyncpa [#allocation9], 0
    %13 = vsyncpa [#allocation4], 0
    // Predicated region
    $region2: #{tpu_custom_call.1} parent=1 // pred_check
      _
    $region3: #{tpu_custom_call.1} parent=1 // pred_check_branch
      %15 = sbr.rel (0) target = $region5
    $region4: #{tpu_custom_call.1} parent=1 // pred_region
      %17 = vsyncadd [#allocation3], 0
      %s19 = sshll.u32 %s0, 4
      %s20 = int_to_ptr.hbm [resolvable:$true] %s19
      %s21 = sshll.u32 [#allocation2], 4
      %s22 = int_to_ptr.vmem [resolvable:$true] %s21
      %24 = dma.hbm_to_vmem [thread:$0]  %s20, 128, %s22, [#allocation3]
    $region5: #{tpu_custom_call.1} parent=1 // pred_fallthru
      _
    // Predicated region
    $region6: #{tpu_custom_call.1} parent=1 // pred_check
      _
    $region7: #{tpu_custom_call.1} parent=1 // pred_check_branch
      %26 = sbr.rel (0) target = $region9
    $region8: #{tpu_custom_call.1} parent=1 // pred_region
      %28 = vsyncadd [#allocation6], 0
      %s29 = sshll.u32 %s1, 4
      %s30 = int_to_ptr.hbm [resolvable:$true] %s29
      %s31 = sshll.u32 [#allocation5], 4
      %s32 = int_to_ptr.vmem [resolvable:$true] %s31
      %37 = dma.hbm_to_vmem [thread:$0]  %s30, 8192, %s32, [#allocation6], 512, 512, 32
    $region9: #{tpu_custom_call.1} parent=1 // pred_fallthru
      _
    // Predicated region
    $region10: #{tpu_custom_call.1} parent=1 // pred_check
      _
    $region11: #{tpu_custom_call.1} parent=1 // pred_check_branch
      %39 = sbr.rel (0) target = $region13
    $region12: #{tpu_custom_call.1} parent=1 // pred_region
      %41 = vsyncadd [#allocation6], 0
      %s43 = sshll.u32 %s2, 4
      %s44 = int_to_ptr.hbm [resolvable:$true] %s43
      %s45 = sshll.u32 [#allocation7], 4
      %s46 = int_to_ptr.vmem [resolvable:$true] %s45
      %48 = dma.hbm_to_vmem [thread:$0]  %s44, 128, %s46, [#allocation6]
    $region13: #{tpu_custom_call.1} parent=1 // pred_fallthru
      _
    // Predicated region
    $region14: #{tpu_custom_call.1} parent=1 // pred_check
      _
    $region15: #{tpu_custom_call.1} parent=1 // pred_check_branch
      %50 = sbr.rel (0) target = $region17
    $region16: #{tpu_custom_call.1} parent=1 // pred_region
      %52 = vsyncadd [#allocation9], 0
      %s53 = sshll.u32 %s3, 4
      %s54 = int_to_ptr.hbm [resolvable:$true] %s53
      %s55 = sshll.u32 [#allocation8], 4
      %s56 = int_to_ptr.vmem [resolvable:$true] %s55
      %61 = dma.hbm_to_vmem [thread:$0]  %s54, 8192, %s56, [#allocation9], 64, 64, 4
    $region17: #{tpu_custom_call.1} parent=1 // pred_fallthru
      _
    // Predicated region
    $region18: #{tpu_custom_call.1} parent=1 // pred_check
      _
    $region19: #{tpu_custom_call.1} parent=1 // pred_check_branch
      %63 = sbr.rel (0) target = $region21
    $region20: #{tpu_custom_call.1} parent=1 // pred_region
      _
    $region21: #{tpu_custom_call.1} parent=1 // pred_fallthru
      _
    // Predicated region
    $region22: #{tpu_custom_call.1} parent=1 // pred_check
      _
    $region23: #{tpu_custom_call.1} parent=1 // pred_check_branch
      %65 = sbr.rel (0) target = $region25
    $region24: #{tpu_custom_call.1} parent=1 // pred_region
      %67 = dma.done [#allocation3], 128
    $region25: #{tpu_custom_call.1} parent=1 // pred_fallthru
      _
    // Predicated region
    $region26: #{tpu_custom_call.1} parent=1 // pred_check
      _
    $region27: #{tpu_custom_call.1} parent=1 // pred_check_branch
      %69 = sbr.rel (0) target = $region29
    $region28: #{tpu_custom_call.1} parent=1 // pred_region
      %71 = dma.done [#allocation6], 8192
    $region29: #{tpu_custom_call.1} parent=1 // pred_fallthru
      _
    // Predicated region
    $region30: #{tpu_custom_call.1} parent=1 // pred_check
      _
    $region31: #{tpu_custom_call.1} parent=1 // pred_check_branch
      %73 = sbr.rel (0) target = $region33
    $region32: #{tpu_custom_call.1} parent=1 // pred_region
      %75 = dma.done [#allocation6], 128
    $region33: #{tpu_custom_call.1} parent=1 // pred_fallthru
      _
    // Predicated region
    $region34: #{tpu_custom_call.1} parent=1 // pred_check
      _
    $region35: #{tpu_custom_call.1} parent=1 // pred_check_branch
      %77 = sbr.rel (0) target = $region37
    $region36: #{tpu_custom_call.1} parent=1 // pred_region
      %79 = dma.done [#allocation9], 8192
    $region37: #{tpu_custom_call.1} parent=1 // pred_fallthru
      _
    %v80 = vld [vmem:[#allocation2] sm:$0xff]
    %v81 = vpack.c.bf16 %v80, %v80
    %v82 = vld [vmem:[#allocation5] sm:$0xff]
    %v83 = vld [vmem:[#allocation5 + $0x8] sm:$0xff]
    %v84 = vld [vmem:[#allocation5 + $0x10] sm:$0xff]
    %v85 = vld [vmem:[#allocation5 + $0x18] sm:$0xff]
    %v86 = vld [vmem:[#allocation5 + $0x20] sm:$0xff]
    %v87 = vld [vmem:[#allocation5 + $0x28] sm:$0xff]
    %v88 = vld [vmem:[#allocation5 + $0x30] sm:$0xff]
    %v89 = vld [vmem:[#allocation5 + $0x38] sm:$0xff]
    %v90 = vld [vmem:[#allocation5 + $0x40] sm:$0xff]
    %v91 = vld [vmem:[#allocation5 + $0x48] sm:$0xff]
    %v92 = vld [vmem:[#allocation5 + $0x50] sm:$0xff]
    %v93 = vld [vmem:[#allocation5 + $0x58] sm:$0xff]
    %v94 = vld [vmem:[#allocation5 + $0x60] sm:$0xff]
    %v95 = vld [vmem:[#allocation5 + $0x68] sm:$0xff]
    %v96 = vld [vmem:[#allocation5 + $0x70] sm:$0xff]
    %v97 = vld [vmem:[#allocation5 + $0x78] sm:$0xff]
    %v98 = vld [vmem:[#allocation5 + $0x80] sm:$0xff]
    %v99 = vld [vmem:[#allocation5 + $0x88] sm:$0xff]
    %v100 = vld [vmem:[#allocation5 + $0x90] sm:$0xff]
    %v101 = vld [vmem:[#allocation5 + $0x98] sm:$0xff]
    %v102 = vld [vmem:[#allocation5 + $0xa0] sm:$0xff]
    %v103 = vld [vmem:[#allocation5 + $0xa8] sm:$0xff]
    %v104 = vld [vmem:[#allocation5 + $0xb0] sm:$0xff]
    %v105 = vld [vmem:[#allocation5 + $0xb8] sm:$0xff]
    %v106 = vld [vmem:[#allocation5 + $0xc0] sm:$0xff]
    %v107 = vld [vmem:[#allocation5 + $0xc8] sm:$0xff]
    %v108 = vld [vmem:[#allocation5 + $0xd0] sm:$0xff]
    %v109 = vld [vmem:[#allocation5 + $0xd8] sm:$0xff]
    %v110 = vld [vmem:[#allocation5 + $0xe0] sm:$0xff]
    %v111 = vld [vmem:[#allocation5 + $0xe8] sm:$0xff]
    %v112 = vld [vmem:[#allocation5 + $0xf0] sm:$0xff]
    %v113 = vld [vmem:[#allocation5 + $0xf8] sm:$0xff]
    %v114 = vld [vmem:[#allocation5 + $0x100] sm:$0xff]
    %v115 = vld [vmem:[#allocation5 + $0x108] sm:$0xff]
    %v116 = vld [vmem:[#allocation5 + $0x110] sm:$0xff]
    %v117 = vld [vmem:[#allocation5 + $0x118] sm:$0xff]
    %v118 = vld [vmem:[#allocation5 + $0x120] sm:$0xff]
    %v119 = vld [vmem:[#allocation5 + $0x128] sm:$0xff]
    %v120 = vld [vmem:[#allocation5 + $0x130] sm:$0xff]
    %v121 = vld [vmem:[#allocation5 + $0x138] sm:$0xff]
    %v122 = vld [vmem:[#allocation5 + $0x140] sm:$0xff]
    %v123 = vld [vmem:[#allocation5 + $0x148] sm:$0xff]
    %v124 = vld [vmem:[#allocation5 + $0x150] sm:$0xff]
    %v125 = vld [vmem:[#allocation5 + $0x158] sm:$0xff]
    %v126 = vld [vmem:[#allocation5 + $0x160] sm:$0xff]
    %v127 = vld [vmem:[#allocation5 + $0x168] sm:$0xff]
    %v128 = vld [vmem:[#allocation5 + $0x170] sm:$0xff]
    %v129 = vld [vmem:[#allocation5 + $0x178] sm:$0xff]
    %v130 = vld [vmem:[#allocation5 + $0x180] sm:$0xff]
    %v131 = vld [vmem:[#allocation5 + $0x188] sm:$0xff]
    %v132 = vld [vmem:[#allocation5 + $0x190] sm:$0xff]
    %v133 = vld [vmem:[#allocation5 + $0x198] sm:$0xff]
    %v134 = vld [vmem:[#allocation5 + $0x1a0] sm:$0xff]
    %v135 = vld [vmem:[#allocation5 + $0x1a8] sm:$0xff]
    %v136 = vld [vmem:[#allocation5 + $0x1b0] sm:$0xff]
    %v137 = vld [vmem:[#allocation5 + $0x1b8] sm:$0xff]
    %v138 = vld [vmem:[#allocation5 + $0x1c0] sm:$0xff]
    %v139 = vld [vmem:[#allocation5 + $0x1c8] sm:$0xff]
    %v140 = vld [vmem:[#allocation5 + $0x1d0] sm:$0xff]
    %v141 = vld [vmem:[#allocation5 + $0x1d8] sm:$0xff]
    %v142 = vld [vmem:[#allocation5 + $0x1e0] sm:$0xff]
    %v143 = vld [vmem:[#allocation5 + $0x1e8] sm:$0xff]
    %v144 = vld [vmem:[#allocation5 + $0x1f0] sm:$0xff]
    %v145 = vld [vmem:[#allocation5 + $0x1f8] sm:$0xff]
    %v146 = vld [vmem:[#allocation7] sm:$0xff]
    %v148 = vperm.slane %v146, 0
    %v149 = vperm.slane %v146, 1
    %v150 = vperm.slane %v146, 2
    %v151 = vperm.slane %v146, 3
    %v152 = vperm.slane %v146, 4
    %v153 = vperm.slane %v146, 5
    %v154 = vperm.slane %v146, 6
    %v155 = vperm.slane %v146, 7
    %v228 = vunpack.c.l.b16 %v82
    %v229 = vunpack.c.h.b16 %v82
    %v230 = vunpack.c.l.b16 %v83
    %v231 = vunpack.c.h.b16 %v83
    %v232 = vunpack.c.l.b16 %v84
    %v233 = vunpack.c.h.b16 %v84
    %v234 = vunpack.c.l.b16 %v85
    %v235 = vunpack.c.h.b16 %v85
    %v236 = vunpack.c.l.b16 %v86
    %v237 = vunpack.c.h.b16 %v86
    %v238 = vunpack.c.l.b16 %v87
    %v239 = vunpack.c.h.b16 %v87
    %v240 = vunpack.c.l.b16 %v88
    %v241 = vunpack.c.h.b16 %v88
    %v242 = vunpack.c.l.b16 %v89
    %v243 = vunpack.c.h.b16 %v89
    %v244 = vunpack.c.l.b16 %v90
    %v245 = vunpack.c.h.b16 %v90
    %v246 = vunpack.c.l.b16 %v91
    %v247 = vunpack.c.h.b16 %v91
    %v248 = vunpack.c.l.b16 %v92
    %v249 = vunpack.c.h.b16 %v92
    %v250 = vunpack.c.l.b16 %v93
    %v251 = vunpack.c.h.b16 %v93
    %v252 = vunpack.c.l.b16 %v94
    %v253 = vunpack.c.h.b16 %v94
    %v254 = vunpack.c.l.b16 %v95
    %v255 = vunpack.c.h.b16 %v95
    %v256 = vunpack.c.l.b16 %v96
    %v257 = vunpack.c.h.b16 %v96
    %v258 = vunpack.c.l.b16 %v97
    %v259 = vunpack.c.h.b16 %v97
    %v260 = vunpack.c.l.b16 %v98
    %v261 = vunpack.c.h.b16 %v98
    %v262 = vunpack.c.l.b16 %v99
    %v263 = vunpack.c.h.b16 %v99
    %v264 = vunpack.c.l.b16 %v100
    %v265 = vunpack.c.h.b16 %v100
    %v266 = vunpack.c.l.b16 %v101
    %v267 = vunpack.c.h.b16 %v101
    %v268 = vunpack.c.l.b16 %v102
    %v269 = vunpack.c.h.b16 %v102
    %v270 = vunpack.c.l.b16 %v103
    %v271 = vunpack.c.h.b16 %v103
    %v272 = vunpack.c.l.b16 %v104
    %v273 = vunpack.c.h.b16 %v104
    %v274 = vunpack.c.l.b16 %v105
    %v275 = vunpack.c.h.b16 %v105
    %v276 = vunpack.c.l.b16 %v106
    %v277 = vunpack.c.h.b16 %v106
    %v278 = vunpack.c.l.b16 %v107
    %v279 = vunpack.c.h.b16 %v107
    %v280 = vunpack.c.l.b16 %v108
    %v281 = vunpack.c.h.b16 %v108
    %v282 = vunpack.c.l.b16 %v109
    %v283 = vunpack.c.h.b16 %v109
    %v284 = vunpack.c.l.b16 %v110
    %v285 = vunpack.c.h.b16 %v110
    %v286 = vunpack.c.l.b16 %v111
    %v287 = vunpack.c.h.b16 %v111
    %v288 = vunpack.c.l.b16 %v112
    %v289 = vunpack.c.h.b16 %v112
    %v290 = vunpack.c.l.b16 %v113
    %v291 = vunpack.c.h.b16 %v113
    %v292 = vunpack.c.l.b16 %v114
    %v293 = vunpack.c.h.b16 %v114
    %v294 = vunpack.c.l.b16 %v115
    %v295 = vunpack.c.h.b16 %v115
    %v296 = vunpack.c.l.b16 %v116
    %v297 = vunpack.c.h.b16 %v116
    %v298 = vunpack.c.l.b16 %v117
    %v299 = vunpack.c.h.b16 %v117
    %v300 = vunpack.c.l.b16 %v118
    %v301 = vunpack.c.h.b16 %v118
    %v302 = vunpack.c.l.b16 %v119
    %v303 = vunpack.c.h.b16 %v119
    %v304 = vunpack.c.l.b16 %v120
    %v305 = vunpack.c.h.b16 %v120
    %v306 = vunpack.c.l.b16 %v121
    %v307 = vunpack.c.h.b16 %v121
    %v308 = vunpack.c.l.b16 %v122
    %v309 = vunpack.c.h.b16 %v122
    %v310 = vunpack.c.l.b16 %v123
    %v311 = vunpack.c.h.b16 %v123
    %v312 = vunpack.c.l.b16 %v124
    %v313 = vunpack.c.h.b16 %v124
    %v314 = vunpack.c.l.b16 %v125
    %v315 = vunpack.c.h.b16 %v125
    %v316 = vunpack.c.l.b16 %v126
    %v317 = vunpack.c.h.b16 %v126
    %v318 = vunpack.c.l.b16 %v127
    %v319 = vunpack.c.h.b16 %v127
    %v320 = vunpack.c.l.b16 %v128
    %v321 = vunpack.c.h.b16 %v128
    %v322 = vunpack.c.l.b16 %v129
    %v323 = vunpack.c.h.b16 %v129
    %v324 = vunpack.c.l.b16 %v130
    %v325 = vunpack.c.h.b16 %v130
    %v326 = vunpack.c.l.b16 %v131
    %v327 = vunpack.c.h.b16 %v131
    %v328 = vunpack.c.l.b16 %v132
    %v329 = vunpack.c.h.b16 %v132
    %v330 = vunpack.c.l.b16 %v133
    %v331 = vunpack.c.h.b16 %v133
    %v332 = vunpack.c.l.b16 %v134
    %v333 = vunpack.c.h.b16 %v134
    %v334 = vunpack.c.l.b16 %v135
    %v335 = vunpack.c.h.b16 %v135
    %v336 = vunpack.c.l.b16 %v136
    %v337 = vunpack.c.h.b16 %v136
    %v338 = vunpack.c.l.b16 %v137
    %v339 = vunpack.c.h.b16 %v137
    %v340 = vunpack.c.l.b16 %v138
    %v341 = vunpack.c.h.b16 %v138
    %v342 = vunpack.c.l.b16 %v139
    %v343 = vunpack.c.h.b16 %v139
    %v344 = vunpack.c.l.b16 %v140
    %v345 = vunpack.c.h.b16 %v140
    %v346 = vunpack.c.l.b16 %v141
    %v347 = vunpack.c.h.b16 %v141
    %v348 = vunpack.c.l.b16 %v142
    %v349 = vunpack.c.h.b16 %v142
    %v350 = vunpack.c.l.b16 %v143
    %v351 = vunpack.c.h.b16 %v143
    %v352 = vunpack.c.l.b16 %v144
    %v353 = vunpack.c.h.b16 %v144
    %v354 = vunpack.c.l.b16 %v145
    %v355 = vunpack.c.h.b16 %v145
    %v356 = vpack.c.b16 %v236, %v228
    %v357 = vpack.c.b16 %v237, %v229
    %v358 = vpack.c.b16 %v238, %v230
    %v359 = vpack.c.b16 %v239, %v231
    %v360 = vpack.c.b16 %v240, %v232
    %v361 = vpack.c.b16 %v241, %v233
    %v362 = vpack.c.b16 %v242, %v234
    %v363 = vpack.c.b16 %v243, %v235
    %v364 = vpack.c.b16 %v252, %v244
    %v365 = vpack.c.b16 %v253, %v245
    %v366 = vpack.c.b16 %v254, %v246
    %v367 = vpack.c.b16 %v255, %v247
    %v368 = vpack.c.b16 %v256, %v248
    %v369 = vpack.c.b16 %v257, %v249
    %v370 = vpack.c.b16 %v258, %v250
    %v371 = vpack.c.b16 %v259, %v251
    %v372 = vpack.c.b16 %v268, %v260
    %v373 = vpack.c.b16 %v269, %v261
    %v374 = vpack.c.b16 %v270, %v262
    %v375 = vpack.c.b16 %v271, %v263
    %v376 = vpack.c.b16 %v272, %v264
    %v377 = vpack.c.b16 %v273, %v265
    %v378 = vpack.c.b16 %v274, %v266
    %v379 = vpack.c.b16 %v275, %v267
    %v380 = vpack.c.b16 %v284, %v276
    %v381 = vpack.c.b16 %v285, %v277
    %v382 = vpack.c.b16 %v286, %v278
    %v383 = vpack.c.b16 %v287, %v279
    %v384 = vpack.c.b16 %v288, %v280
    %v385 = vpack.c.b16 %v289, %v281
    %v386 = vpack.c.b16 %v290, %v282
    %v387 = vpack.c.b16 %v291, %v283
    %v388 = vpack.c.b16 %v300, %v292
    %v389 = vpack.c.b16 %v301, %v293
    %v390 = vpack.c.b16 %v302, %v294
    %v391 = vpack.c.b16 %v303, %v295
    %v392 = vpack.c.b16 %v304, %v296
    %v393 = vpack.c.b16 %v305, %v297
    %v394 = vpack.c.b16 %v306, %v298
    %v395 = vpack.c.b16 %v307, %v299
    %v396 = vpack.c.b16 %v316, %v308
    %v397 = vpack.c.b16 %v317, %v309
    %v398 = vpack.c.b16 %v318, %v310
    %v399 = vpack.c.b16 %v319, %v311
    %v400 = vpack.c.b16 %v320, %v312
    %v401 = vpack.c.b16 %v321, %v313
    %v402 = vpack.c.b16 %v322, %v314
    %v403 = vpack.c.b16 %v323, %v315
    %v404 = vpack.c.b16 %v332, %v324
    %v405 = vpack.c.b16 %v333, %v325
    %v406 = vpack.c.b16 %v334, %v326
    %v407 = vpack.c.b16 %v335, %v327
    %v408 = vpack.c.b16 %v336, %v328
    %v409 = vpack.c.b16 %v337, %v329
    %v410 = vpack.c.b16 %v338, %v330
    %v411 = vpack.c.b16 %v339, %v331
    %v412 = vpack.c.b16 %v348, %v340
    %v413 = vpack.c.b16 %v349, %v341
    %v414 = vpack.c.b16 %v350, %v342
    %v415 = vpack.c.b16 %v351, %v343
    %v416 = vpack.c.b16 %v352, %v344
    %v417 = vpack.c.b16 %v353, %v345
    %v418 = vpack.c.b16 %v354, %v346
    %v419 = vpack.c.b16 %v355, %v347
    %484 = vmatpush.bf16.msra.mxu0 %v412
    %485 = vmatpush.bf16.msra.mxu0 %v404
    %486 = vmatpush.bf16.msra.mxu0 %v396
    %487 = vmatpush.bf16.msra.mxu0 %v388
    %488 = vmatpush.bf16.msra.mxu0 %v380
    %489 = vmatpush.bf16.msra.mxu0 %v372
    %490 = vmatpush.bf16.msra.mxu0 %v364
    %491 = vmatpush.bf16.msra.mxu0 %v356
    %492 = vmatmul.bf16.gmra.mxu0 %v81
    %v493 = vpop.f32.mrf.mxu0
    %v494 = vadd.f32 %v148, %v493
    %v495 = vpop.f32.mrf.mxu0
    %496 = vdwg.mxu0
    %497 = vmatpush.bf16.msra.mxu0 %v413
    %498 = vmatpush.bf16.msra.mxu0 %v405
    %499 = vmatpush.bf16.msra.mxu0 %v397
    %500 = vmatpush.bf16.msra.mxu0 %v389
    %501 = vmatpush.bf16.msra.mxu0 %v381
    %502 = vmatpush.bf16.msra.mxu0 %v373
    %503 = vmatpush.bf16.msra.mxu0 %v365
    %504 = vmatpush.bf16.msra.mxu0 %v357
    %505 = vmatmul.bf16.gmra.mxu0 %v81
    %v506 = vpop.f32.mrf.mxu0
    %v507 = vadd.f32 %v149, %v506
    %v508 = vpop.f32.mrf.mxu0
    %509 = vdwg.mxu0
    %510 = vmatpush.bf16.msra.mxu0 %v414
    %511 = vmatpush.bf16.msra.mxu0 %v406
    %512 = vmatpush.bf16.msra.mxu0 %v398
    %513 = vmatpush.bf16.msra.mxu0 %v390
    %514 = vmatpush.bf16.msra.mxu0 %v382
    %515 = vmatpush.bf16.msra.mxu0 %v374
    %516 = vmatpush.bf16.msra.mxu0 %v366
    %517 = vmatpush.bf16.msra.mxu0 %v358
    %518 = vmatmul.bf16.gmra.mxu0 %v81
    %v519 = vpop.f32.mrf.mxu0
    %v520 = vadd.f32 %v150, %v519
    %v521 = vpop.f32.mrf.mxu0
    %522 = vdwg.mxu0
    %523 = vmatpush.bf16.msra.mxu0 %v415
    %524 = vmatpush.bf16.msra.mxu0 %v407
    %525 = vmatpush.bf16.msra.mxu0 %v399
    %526 = vmatpush.bf16.msra.mxu0 %v391
    %527 = vmatpush.bf16.msra.mxu0 %v383
    %528 = vmatpush.bf16.msra.mxu0 %v375
    %529 = vmatpush.bf16.msra.mxu0 %v367
    %530 = vmatpush.bf16.msra.mxu0 %v359
    %531 = vmatmul.bf16.gmra.mxu0 %v81
    %v532 = vpop.f32.mrf.mxu0
    %v533 = vadd.f32 %v151, %v532
    %v534 = vpop.f32.mrf.mxu0
    %535 = vdwg.mxu0
    %536 = vmatpush.bf16.msra.mxu0 %v416
    %537 = vmatpush.bf16.msra.mxu0 %v408
    %538 = vmatpush.bf16.msra.mxu0 %v400
    %539 = vmatpush.bf16.msra.mxu0 %v392
    %540 = vmatpush.bf16.msra.mxu0 %v384
    %541 = vmatpush.bf16.msra.mxu0 %v376
    %542 = vmatpush.bf16.msra.mxu0 %v368
    %543 = vmatpush.bf16.msra.mxu0 %v360
    %544 = vmatmul.bf16.gmra.mxu0 %v81
    %v545 = vpop.f32.mrf.mxu0
    %v546 = vadd.f32 %v152, %v545
    %v547 = vpop.f32.mrf.mxu0
    %548 = vdwg.mxu0
    %549 = vmatpush.bf16.msra.mxu0 %v417
    %550 = vmatpush.bf16.msra.mxu0 %v409
    %551 = vmatpush.bf16.msra.mxu0 %v401
    %552 = vmatpush.bf16.msra.mxu0 %v393
    %553 = vmatpush.bf16.msra.mxu0 %v385
    %554 = vmatpush.bf16.msra.mxu0 %v377
    %555 = vmatpush.bf16.msra.mxu0 %v369
    %556 = vmatpush.bf16.msra.mxu0 %v361
    %557 = vmatmul.bf16.gmra.mxu0 %v81
    %v558 = vpop.f32.mrf.mxu0
    %v559 = vadd.f32 %v153, %v558
    %v560 = vpop.f32.mrf.mxu0
    %561 = vdwg.mxu0
    %562 = vmatpush.bf16.msra.mxu0 %v418
    %563 = vmatpush.bf16.msra.mxu0 %v410
    %564 = vmatpush.bf16.msra.mxu0 %v402
    %565 = vmatpush.bf16.msra.mxu0 %v394
    %566 = vmatpush.bf16.msra.mxu0 %v386
    %567 = vmatpush.bf16.msra.mxu0 %v378
    %568 = vmatpush.bf16.msra.mxu0 %v370
    %569 = vmatpush.bf16.msra.mxu0 %v362
    %570 = vmatmul.bf16.gmra.mxu0 %v81
    %v571 = vpop.f32.mrf.mxu0
    %v572 = vadd.f32 %v154, %v571
    %v573 = vpop.f32.mrf.mxu0
    %574 = vdwg.mxu0
    %575 = vmatpush.bf16.msra.mxu0 %v419
    %576 = vmatpush.bf16.msra.mxu0 %v411
    %577 = vmatpush.bf16.msra.mxu0 %v403
    %578 = vmatpush.bf16.msra.mxu0 %v395
    %579 = vmatpush.bf16.msra.mxu0 %v387
    %580 = vmatpush.bf16.msra.mxu0 %v379
    %581 = vmatpush.bf16.msra.mxu0 %v371
    %582 = vmatpush.bf16.msra.mxu0 %v363
    %583 = vmatmul.bf16.gmra.mxu0 %v81
    %v584 = vpop.f32.mrf.mxu0
    %v585 = vadd.f32 %v155, %v584
    %v586 = vpop.f32.mrf.mxu0
    %587 = vdwg.mxu0
    %v588 = vmax.f32 %v494, 0.0
    %v589 = vmax.f32 %v507, 0.0
    %v590 = vmax.f32 %v520, 0.0
    %v591 = vmax.f32 %v533, 0.0
    %v592 = vmax.f32 %v546, 0.0
    %v593 = vmax.f32 %v559, 0.0
    %v594 = vmax.f32 %v572, 0.0
    %v595 = vmax.f32 %v585, 0.0
    %v596 = vpack.c.bf16 %v588, %v588
    %v597 = vpack.c.bf16 %v589, %v589
    %v598 = vpack.c.bf16 %v590, %v590
    %v599 = vpack.c.bf16 %v591, %v591
    %v600 = vpack.c.bf16 %v592, %v592
    %v601 = vpack.c.bf16 %v593, %v593
    %v602 = vpack.c.bf16 %v594, %v594
    %v603 = vpack.c.bf16 %v595, %v595
    %v604 = vld [vmem:[#allocation8] sm:$0xf]
    %v605 = vld [vmem:[#allocation8 + $0x4] sm:$0xf]
    %v606 = vld [vmem:[#allocation8 + $0x8] sm:$0xf]
    %v607 = vld [vmem:[#allocation8 + $0xc] sm:$0xf]
    %v608 = vld [vmem:[#allocation8 + $0x10] sm:$0xf]
    %v609 = vld [vmem:[#allocation8 + $0x14] sm:$0xf]
    %v610 = vld [vmem:[#allocation8 + $0x18] sm:$0xf]
    %v611 = vld [vmem:[#allocation8 + $0x1c] sm:$0xf]
    %v612 = vld [vmem:[#allocation8 + $0x20] sm:$0xf]
    %v613 = vld [vmem:[#allocation8 + $0x24] sm:$0xf]
    %v614 = vld [vmem:[#allocation8 + $0x28] sm:$0xf]
    %v615 = vld [vmem:[#allocation8 + $0x2c] sm:$0xf]
    %v616 = vld [vmem:[#allocation8 + $0x30] sm:$0xf]
    %v617 = vld [vmem:[#allocation8 + $0x34] sm:$0xf]
    %v618 = vld [vmem:[#allocation8 + $0x38] sm:$0xf]
    %v619 = vld [vmem:[#allocation8 + $0x3c] sm:$0xf]
    %v620 = vld [vmem:[#allocation8 + $0x40] sm:$0xf]
    %v621 = vld [vmem:[#allocation8 + $0x44] sm:$0xf]
    %v622 = vld [vmem:[#allocation8 + $0x48] sm:$0xf]
    %v623 = vld [vmem:[#allocation8 + $0x4c] sm:$0xf]
    %v624 = vld [vmem:[#allocation8 + $0x50] sm:$0xf]
    %v625 = vld [vmem:[#allocation8 + $0x54] sm:$0xf]
    %v626 = vld [vmem:[#allocation8 + $0x58] sm:$0xf]
    %v627 = vld [vmem:[#allocation8 + $0x5c] sm:$0xf]
    %v628 = vld [vmem:[#allocation8 + $0x60] sm:$0xf]
    %v629 = vld [vmem:[#allocation8 + $0x64] sm:$0xf]
    %v630 = vld [vmem:[#allocation8 + $0x68] sm:$0xf]
    %v631 = vld [vmem:[#allocation8 + $0x6c] sm:$0xf]
    %v632 = vld [vmem:[#allocation8 + $0x70] sm:$0xf]
    %v633 = vld [vmem:[#allocation8 + $0x74] sm:$0xf]
    %v634 = vld [vmem:[#allocation8 + $0x78] sm:$0xf]
    %v635 = vld [vmem:[#allocation8 + $0x7c] sm:$0xf]
    %v636 = vld [vmem:[#allocation8 + $0x80] sm:$0xf]
    %v637 = vld [vmem:[#allocation8 + $0x84] sm:$0xf]
    %v638 = vld [vmem:[#allocation8 + $0x88] sm:$0xf]
    %v639 = vld [vmem:[#allocation8 + $0x8c] sm:$0xf]
    %v640 = vld [vmem:[#allocation8 + $0x90] sm:$0xf]
    %v641 = vld [vmem:[#allocation8 + $0x94] sm:$0xf]
    %v642 = vld [vmem:[#allocation8 + $0x98] sm:$0xf]
    %v643 = vld [vmem:[#allocation8 + $0x9c] sm:$0xf]
    %v644 = vld [vmem:[#allocation8 + $0xa0] sm:$0xf]
    %v645 = vld [vmem:[#allocation8 + $0xa4] sm:$0xf]
    %v646 = vld [vmem:[#allocation8 + $0xa8] sm:$0xf]
    %v647 = vld [vmem:[#allocation8 + $0xac] sm:$0xf]
    %v648 = vld [vmem:[#allocation8 + $0xb0] sm:$0xf]
    %v649 = vld [vmem:[#allocation8 + $0xb4] sm:$0xf]
    %v650 = vld [vmem:[#allocation8 + $0xb8] sm:$0xf]
    %v651 = vld [vmem:[#allocation8 + $0xbc] sm:$0xf]
    %v652 = vld [vmem:[#allocation8 + $0xc0] sm:$0xf]
    %v653 = vld [vmem:[#allocation8 + $0xc4] sm:$0xf]
    %v654 = vld [vmem:[#allocation8 + $0xc8] sm:$0xf]
    %v655 = vld [vmem:[#allocation8 + $0xcc] sm:$0xf]
    %v656 = vld [vmem:[#allocation8 + $0xd0] sm:$0xf]
    %v657 = vld [vmem:[#allocation8 + $0xd4] sm:$0xf]
    %v658 = vld [vmem:[#allocation8 + $0xd8] sm:$0xf]
    %v659 = vld [vmem:[#allocation8 + $0xdc] sm:$0xf]
    %v660 = vld [vmem:[#allocation8 + $0xe0] sm:$0xf]
    %v661 = vld [vmem:[#allocation8 + $0xe4] sm:$0xf]
    %v662 = vld [vmem:[#allocation8 + $0xe8] sm:$0xf]
    %v663 = vld [vmem:[#allocation8 + $0xec] sm:$0xf]
    %v664 = vld [vmem:[#allocation8 + $0xf0] sm:$0xf]
    %v665 = vld [vmem:[#allocation8 + $0xf4] sm:$0xf]
    %v666 = vld [vmem:[#allocation8 + $0xf8] sm:$0xf]
    %v667 = vld [vmem:[#allocation8 + $0xfc] sm:$0xf]
    %v668 = vld [vmem:[#allocation8 + $0x100] sm:$0xf]
    %v669 = vld [vmem:[#allocation8 + $0x104] sm:$0xf]
    %v670 = vld [vmem:[#allocation8 + $0x108] sm:$0xf]
    %v671 = vld [vmem:[#allocation8 + $0x10c] sm:$0xf]
    %v672 = vld [vmem:[#allocation8 + $0x110] sm:$0xf]
    %v673 = vld [vmem:[#allocation8 + $0x114] sm:$0xf]
    %v674 = vld [vmem:[#allocation8 + $0x118] sm:$0xf]
    %v675 = vld [vmem:[#allocation8 + $0x11c] sm:$0xf]
    %v676 = vld [vmem:[#allocation8 + $0x120] sm:$0xf]
    %v677 = vld [vmem:[#allocation8 + $0x124] sm:$0xf]
    %v678 = vld [vmem:[#allocation8 + $0x128] sm:$0xf]
    %v679 = vld [vmem:[#allocation8 + $0x12c] sm:$0xf]
    %v680 = vld [vmem:[#allocation8 + $0x130] sm:$0xf]
    %v681 = vld [vmem:[#allocation8 + $0x134] sm:$0xf]
    %v682 = vld [vmem:[#allocation8 + $0x138] sm:$0xf]
    %v683 = vld [vmem:[#allocation8 + $0x13c] sm:$0xf]
    %v684 = vld [vmem:[#allocation8 + $0x140] sm:$0xf]
    %v685 = vld [vmem:[#allocation8 + $0x144] sm:$0xf]
    %v686 = vld [vmem:[#allocation8 + $0x148] sm:$0xf]
    %v687 = vld [vmem:[#allocation8 + $0x14c] sm:$0xf]
    %v688 = vld [vmem:[#allocation8 + $0x150] sm:$0xf]
    %v689 = vld [vmem:[#allocation8 + $0x154] sm:$0xf]
    %v690 = vld [vmem:[#allocation8 + $0x158] sm:$0xf]
    %v691 = vld [vmem:[#allocation8 + $0x15c] sm:$0xf]
    %v692 = vld [vmem:[#allocation8 + $0x160] sm:$0xf]
    %v693 = vld [vmem:[#allocation8 + $0x164] sm:$0xf]
    %v694 = vld [vmem:[#allocation8 + $0x168] sm:$0xf]
    %v695 = vld [vmem:[#allocation8 + $0x16c] sm:$0xf]
    %v696 = vld [vmem:[#allocation8 + $0x170] sm:$0xf]
    %v697 = vld [vmem:[#allocation8 + $0x174] sm:$0xf]
    %v698 = vld [vmem:[#allocation8 + $0x178] sm:$0xf]
    %v699 = vld [vmem:[#allocation8 + $0x17c] sm:$0xf]
    %v700 = vld [vmem:[#allocation8 + $0x180] sm:$0xf]
    %v701 = vld [vmem:[#allocation8 + $0x184] sm:$0xf]
    %v702 = vld [vmem:[#allocation8 + $0x188] sm:$0xf]
    %v703 = vld [vmem:[#allocation8 + $0x18c] sm:$0xf]
    %v704 = vld [vmem:[#allocation8 + $0x190] sm:$0xf]
    %v705 = vld [vmem:[#allocation8 + $0x194] sm:$0xf]
    %v706 = vld [vmem:[#allocation8 + $0x198] sm:$0xf]
    %v707 = vld [vmem:[#allocation8 + $0x19c] sm:$0xf]
    %v708 = vld [vmem:[#allocation8 + $0x1a0] sm:$0xf]
    %v709 = vld [vmem:[#allocation8 + $0x1a4] sm:$0xf]
    %v710 = vld [vmem:[#allocation8 + $0x1a8] sm:$0xf]
    %v711 = vld [vmem:[#allocation8 + $0x1ac] sm:$0xf]
    %v712 = vld [vmem:[#allocation8 + $0x1b0] sm:$0xf]
    %v713 = vld [vmem:[#allocation8 + $0x1b4] sm:$0xf]
    %v714 = vld [vmem:[#allocation8 + $0x1b8] sm:$0xf]
    %v715 = vld [vmem:[#allocation8 + $0x1bc] sm:$0xf]
    %v716 = vld [vmem:[#allocation8 + $0x1c0] sm:$0xf]
    %v717 = vld [vmem:[#allocation8 + $0x1c4] sm:$0xf]
    %v718 = vld [vmem:[#allocation8 + $0x1c8] sm:$0xf]
    %v719 = vld [vmem:[#allocation8 + $0x1cc] sm:$0xf]
    %v720 = vld [vmem:[#allocation8 + $0x1d0] sm:$0xf]
    %v721 = vld [vmem:[#allocation8 + $0x1d4] sm:$0xf]
    %v722 = vld [vmem:[#allocation8 + $0x1d8] sm:$0xf]
    %v723 = vld [vmem:[#allocation8 + $0x1dc] sm:$0xf]
    %v724 = vld [vmem:[#allocation8 + $0x1e0] sm:$0xf]
    %v725 = vld [vmem:[#allocation8 + $0x1e4] sm:$0xf]
    %v726 = vld [vmem:[#allocation8 + $0x1e8] sm:$0xf]
    %v727 = vld [vmem:[#allocation8 + $0x1ec] sm:$0xf]
    %v728 = vld [vmem:[#allocation8 + $0x1f0] sm:$0xf]
    %v729 = vld [vmem:[#allocation8 + $0x1f4] sm:$0xf]
    %v730 = vld [vmem:[#allocation8 + $0x1f8] sm:$0xf]
    %v731 = vld [vmem:[#allocation8 + $0x1fc] sm:$0xf]
    %v732 = vld [vmem:[%s4] sm:$0x1]
    %v734 = vperm.slane %v732, 0
    %v864 = vunpack.c.l.b16 %v604
    %v865 = vunpack.c.l.b16 %v605
    %v866 = vunpack.c.l.b16 %v606
    %v867 = vunpack.c.l.b16 %v607
    %v868 = vunpack.c.l.b16 %v608
    %v869 = vunpack.c.l.b16 %v609
    %v870 = vunpack.c.l.b16 %v610
    %v871 = vunpack.c.l.b16 %v611
    %v872 = vunpack.c.l.b16 %v612
    %v873 = vunpack.c.l.b16 %v613
    %v874 = vunpack.c.l.b16 %v614
    %v875 = vunpack.c.l.b16 %v615
    %v876 = vunpack.c.l.b16 %v616
    %v877 = vunpack.c.l.b16 %v617
    %v878 = vunpack.c.l.b16 %v618
    %v879 = vunpack.c.l.b16 %v619
    %v880 = vunpack.c.l.b16 %v620
    %v881 = vunpack.c.l.b16 %v621
    %v882 = vunpack.c.l.b16 %v622
    %v883 = vunpack.c.l.b16 %v623
    %v884 = vunpack.c.l.b16 %v624
    %v885 = vunpack.c.l.b16 %v625
    %v886 = vunpack.c.l.b16 %v626
    %v887 = vunpack.c.l.b16 %v627
    %v888 = vunpack.c.l.b16 %v628
    %v889 = vunpack.c.l.b16 %v629
    %v890 = vunpack.c.l.b16 %v630
    %v891 = vunpack.c.l.b16 %v631
    %v892 = vunpack.c.l.b16 %v632
    %v893 = vunpack.c.l.b16 %v633
    %v894 = vunpack.c.l.b16 %v634
    %v895 = vunpack.c.l.b16 %v635
    %v896 = vunpack.c.l.b16 %v636
    %v897 = vunpack.c.l.b16 %v637
    %v898 = vunpack.c.l.b16 %v638
    %v899 = vunpack.c.l.b16 %v639
    %v900 = vunpack.c.l.b16 %v640
    %v901 = vunpack.c.l.b16 %v641
    %v902 = vunpack.c.l.b16 %v642
    %v903 = vunpack.c.l.b16 %v643
    %v904 = vunpack.c.l.b16 %v644
    %v905 = vunpack.c.l.b16 %v645
    %v906 = vunpack.c.l.b16 %v646
    %v907 = vunpack.c.l.b16 %v647
    %v908 = vunpack.c.l.b16 %v648
    %v909 = vunpack.c.l.b16 %v649
    %v910 = vunpack.c.l.b16 %v650
    %v911 = vunpack.c.l.b16 %v651
    %v912 = vunpack.c.l.b16 %v652
    %v913 = vunpack.c.l.b16 %v653
    %v914 = vunpack.c.l.b16 %v654
    %v915 = vunpack.c.l.b16 %v655
    %v916 = vunpack.c.l.b16 %v656
    %v917 = vunpack.c.l.b16 %v657
    %v918 = vunpack.c.l.b16 %v658
    %v919 = vunpack.c.l.b16 %v659
    %v920 = vunpack.c.l.b16 %v660
    %v921 = vunpack.c.l.b16 %v661
    %v922 = vunpack.c.l.b16 %v662
    %v923 = vunpack.c.l.b16 %v663
    %v924 = vunpack.c.l.b16 %v664
    %v925 = vunpack.c.l.b16 %v665
    %v926 = vunpack.c.l.b16 %v666
    %v927 = vunpack.c.l.b16 %v667
    %v928 = vunpack.c.l.b16 %v668
    %v929 = vunpack.c.l.b16 %v669
    %v930 = vunpack.c.l.b16 %v670
    %v931 = vunpack.c.l.b16 %v671
    %v932 = vunpack.c.l.b16 %v672
    %v933 = vunpack.c.l.b16 %v673
    %v934 = vunpack.c.l.b16 %v674
    %v935 = vunpack.c.l.b16 %v675
    %v936 = vunpack.c.l.b16 %v676
    %v937 = vunpack.c.l.b16 %v677
    %v938 = vunpack.c.l.b16 %v678
    %v939 = vunpack.c.l.b16 %v679
    %v940 = vunpack.c.l.b16 %v680
    %v941 = vunpack.c.l.b16 %v681
    %v942 = vunpack.c.l.b16 %v682
    %v943 = vunpack.c.l.b16 %v683
    %v944 = vunpack.c.l.b16 %v684
    %v945 = vunpack.c.l.b16 %v685
    %v946 = vunpack.c.l.b16 %v686
    %v947 = vunpack.c.l.b16 %v687
    %v948 = vunpack.c.l.b16 %v688
    %v949 = vunpack.c.l.b16 %v689
    %v950 = vunpack.c.l.b16 %v690
    %v951 = vunpack.c.l.b16 %v691
    %v952 = vunpack.c.l.b16 %v692
    %v953 = vunpack.c.l.b16 %v693
    %v954 = vunpack.c.l.b16 %v694
    %v955 = vunpack.c.l.b16 %v695
    %v956 = vunpack.c.l.b16 %v696
    %v957 = vunpack.c.l.b16 %v697
    %v958 = vunpack.c.l.b16 %v698
    %v959 = vunpack.c.l.b16 %v699
    %v960 = vunpack.c.l.b16 %v700
    %v961 = vunpack.c.l.b16 %v701
    %v962 = vunpack.c.l.b16 %v702
    %v963 = vunpack.c.l.b16 %v703
    %v964 = vunpack.c.l.b16 %v704
    %v965 = vunpack.c.l.b16 %v705
    %v966 = vunpack.c.l.b16 %v706
    %v967 = vunpack.c.l.b16 %v707
    %v968 = vunpack.c.l.b16 %v708
    %v969 = vunpack.c.l.b16 %v709
    %v970 = vunpack.c.l.b16 %v710
    %v971 = vunpack.c.l.b16 %v711
    %v972 = vunpack.c.l.b16 %v712
    %v973 = vunpack.c.l.b16 %v713
    %v974 = vunpack.c.l.b16 %v714
    %v975 = vunpack.c.l.b16 %v715
    %v976 = vunpack.c.l.b16 %v716
    %v977 = vunpack.c.l.b16 %v717
    %v978 = vunpack.c.l.b16 %v718
    %v979 = vunpack.c.l.b16 %v719
    %v980 = vunpack.c.l.b16 %v720
    %v981 = vunpack.c.l.b16 %v721
    %v982 = vunpack.c.l.b16 %v722
    %v983 = vunpack.c.l.b16 %v723
    %v984 = vunpack.c.l.b16 %v724
    %v985 = vunpack.c.l.b16 %v725
    %v986 = vunpack.c.l.b16 %v726
    %v987 = vunpack.c.l.b16 %v727
    %v988 = vunpack.c.l.b16 %v728
    %v989 = vunpack.c.l.b16 %v729
    %v990 = vunpack.c.l.b16 %v730
    %v991 = vunpack.c.l.b16 %v731
    %v992 = vpack.c.b16 %v865, %v864
    %v993 = vpack.c.b16 %v867, %v866
    %v994 = vpack.c.b16 %v869, %v868
    %v995 = vpack.c.b16 %v871, %v870
    %v996 = vpack.c.b16 %v873, %v872
    %v997 = vpack.c.b16 %v875, %v874
    %v998 = vpack.c.b16 %v877, %v876
    %v999 = vpack.c.b16 %v879, %v878
    %v1000 = vpack.c.b16 %v881, %v880
    %v1001 = vpack.c.b16 %v883, %v882
    %v1002 = vpack.c.b16 %v885, %v884
    %v1003 = vpack.c.b16 %v887, %v886
    %v1004 = vpack.c.b16 %v889, %v888
    %v1005 = vpack.c.b16 %v891, %v890
    %v1006 = vpack.c.b16 %v893, %v892
    %v1007 = vpack.c.b16 %v895, %v894
    %v1008 = vpack.c.b16 %v897, %v896
    %v1009 = vpack.c.b16 %v899, %v898
    %v1010 = vpack.c.b16 %v901, %v900
    %v1011 = vpack.c.b16 %v903, %v902
    %v1012 = vpack.c.b16 %v905, %v904
    %v1013 = vpack.c.b16 %v907, %v906
    %v1014 = vpack.c.b16 %v909, %v908
    %v1015 = vpack.c.b16 %v911, %v910
    %v1016 = vpack.c.b16 %v913, %v912
    %v1017 = vpack.c.b16 %v915, %v914
    %v1018 = vpack.c.b16 %v917, %v916
    %v1019 = vpack.c.b16 %v919, %v918
    %v1020 = vpack.c.b16 %v921, %v920
    %v1021 = vpack.c.b16 %v923, %v922
    %v1022 = vpack.c.b16 %v925, %v924
    %v1023 = vpack.c.b16 %v927, %v926
    %v1024 = vpack.c.b16 %v929, %v928
    %v1025 = vpack.c.b16 %v931, %v930
    %v1026 = vpack.c.b16 %v933, %v932
    %v1027 = vpack.c.b16 %v935, %v934
    %v1028 = vpack.c.b16 %v937, %v936
    %v1029 = vpack.c.b16 %v939, %v938
    %v1030 = vpack.c.b16 %v941, %v940
    %v1031 = vpack.c.b16 %v943, %v942
    %v1032 = vpack.c.b16 %v945, %v944
    %v1033 = vpack.c.b16 %v947, %v946
    %v1034 = vpack.c.b16 %v949, %v948
    %v1035 = vpack.c.b16 %v951, %v950
    %v1036 = vpack.c.b16 %v953, %v952
    %v1037 = vpack.c.b16 %v955, %v954
    %v1038 = vpack.c.b16 %v957, %v956
    %v1039 = vpack.c.b16 %v959, %v958
    %v1040 = vpack.c.b16 %v961, %v960
    %v1041 = vpack.c.b16 %v963, %v962
    %v1042 = vpack.c.b16 %v965, %v964
    %v1043 = vpack.c.b16 %v967, %v966
    %v1044 = vpack.c.b16 %v969, %v968
    %v1045 = vpack.c.b16 %v971, %v970
    %v1046 = vpack.c.b16 %v973, %v972
    %v1047 = vpack.c.b16 %v975, %v974
    %v1048 = vpack.c.b16 %v977, %v976
    %v1049 = vpack.c.b16 %v979, %v978
    %v1050 = vpack.c.b16 %v981, %v980
    %v1051 = vpack.c.b16 %v983, %v982
    %v1052 = vpack.c.b16 %v985, %v984
    %v1053 = vpack.c.b16 %v987, %v986
    %v1054 = vpack.c.b16 %v989, %v988
    %v1055 = vpack.c.b16 %v991, %v990
    %1120 = vmatpush.bf16.msra.mxu0 %v999
    %1121 = vmatpush.bf16.msra.mxu0 %v998
    %1122 = vmatpush.bf16.msra.mxu0 %v997
    %1123 = vmatpush.bf16.msra.mxu0 %v996
    %1124 = vmatpush.bf16.msra.mxu0 %v995
    %1125 = vmatpush.bf16.msra.mxu0 %v994
    %1126 = vmatpush.bf16.msra.mxu0 %v993
    %1127 = vmatpush.bf16.msra.mxu0 %v992
    %1128 = vmatmul.bf16.gmra.mxu0 %v596
    %v1129 = vpop.f32.mrf.mxu0
    %v1130 = vadd.f32 %v734, %v1129
    %v1131 = vpop.f32.mrf.mxu0
    %1132 = vdwg.mxu0
    %1133 = vmatpush.bf16.msra.mxu0 %v1007
    %1134 = vmatpush.bf16.msra.mxu0 %v1006
    %1135 = vmatpush.bf16.msra.mxu0 %v1005
    %1136 = vmatpush.bf16.msra.mxu0 %v1004
    %1137 = vmatpush.bf16.msra.mxu0 %v1003
    %1138 = vmatpush.bf16.msra.mxu0 %v1002
    %1139 = vmatpush.bf16.msra.mxu0 %v1001
    %1140 = vmatpush.bf16.msra.mxu0 %v1000
    %1141 = vmatmul.bf16.gmra.mxu0 %v597
    %v1142 = vpop.f32.mrf.mxu0
    %v1143 = vadd.f32 %v1130, %v1142
    %v1144 = vpop.f32.mrf.mxu0
    %1145 = vdwg.mxu0
    %1146 = vmatpush.bf16.msra.mxu0 %v1015
    %1147 = vmatpush.bf16.msra.mxu0 %v1014
    %1148 = vmatpush.bf16.msra.mxu0 %v1013
    %1149 = vmatpush.bf16.msra.mxu0 %v1012
    %1150 = vmatpush.bf16.msra.mxu0 %v1011
    %1151 = vmatpush.bf16.msra.mxu0 %v1010
    %1152 = vmatpush.bf16.msra.mxu0 %v1009
    %1153 = vmatpush.bf16.msra.mxu0 %v1008
    %1154 = vmatmul.bf16.gmra.mxu0 %v598
    %v1155 = vpop.f32.mrf.mxu0
    %v1156 = vadd.f32 %v1143, %v1155
    %v1157 = vpop.f32.mrf.mxu0
    %1158 = vdwg.mxu0
    %1159 = vmatpush.bf16.msra.mxu0 %v1023
    %1160 = vmatpush.bf16.msra.mxu0 %v1022
    %1161 = vmatpush.bf16.msra.mxu0 %v1021
    %1162 = vmatpush.bf16.msra.mxu0 %v1020
    %1163 = vmatpush.bf16.msra.mxu0 %v1019
    %1164 = vmatpush.bf16.msra.mxu0 %v1018
    %1165 = vmatpush.bf16.msra.mxu0 %v1017
    %1166 = vmatpush.bf16.msra.mxu0 %v1016
    %1167 = vmatmul.bf16.gmra.mxu0 %v599
    %v1168 = vpop.f32.mrf.mxu0
    %v1169 = vadd.f32 %v1156, %v1168
    %v1170 = vpop.f32.mrf.mxu0
    %1171 = vdwg.mxu0
    %1172 = vmatpush.bf16.msra.mxu0 %v1031
    %1173 = vmatpush.bf16.msra.mxu0 %v1030
    %1174 = vmatpush.bf16.msra.mxu0 %v1029
    %1175 = vmatpush.bf16.msra.mxu0 %v1028
    %1176 = vmatpush.bf16.msra.mxu0 %v1027
    %1177 = vmatpush.bf16.msra.mxu0 %v1026
    %1178 = vmatpush.bf16.msra.mxu0 %v1025
    %1179 = vmatpush.bf16.msra.mxu0 %v1024
    %1180 = vmatmul.bf16.gmra.mxu0 %v600
    %v1181 = vpop.f32.mrf.mxu0
    %v1182 = vadd.f32 %v1169, %v1181
    %v1183 = vpop.f32.mrf.mxu0
    %1184 = vdwg.mxu0
    %1185 = vmatpush.bf16.msra.mxu0 %v1039
    %1186 = vmatpush.bf16.msra.mxu0 %v1038
    %1187 = vmatpush.bf16.msra.mxu0 %v1037
    %1188 = vmatpush.bf16.msra.mxu0 %v1036
    %1189 = vmatpush.bf16.msra.mxu0 %v1035
    %1190 = vmatpush.bf16.msra.mxu0 %v1034
    %1191 = vmatpush.bf16.msra.mxu0 %v1033
    %1192 = vmatpush.bf16.msra.mxu0 %v1032
    %1193 = vmatmul.bf16.gmra.mxu0 %v601
    %v1194 = vpop.f32.mrf.mxu0
    %v1195 = vadd.f32 %v1182, %v1194
    %v1196 = vpop.f32.mrf.mxu0
    %1197 = vdwg.mxu0
    %1198 = vmatpush.bf16.msra.mxu0 %v1047
    %1199 = vmatpush.bf16.msra.mxu0 %v1046
    %1200 = vmatpush.bf16.msra.mxu0 %v1045
    %1201 = vmatpush.bf16.msra.mxu0 %v1044
    %1202 = vmatpush.bf16.msra.mxu0 %v1043
    %1203 = vmatpush.bf16.msra.mxu0 %v1042
    %1204 = vmatpush.bf16.msra.mxu0 %v1041
    %1205 = vmatpush.bf16.msra.mxu0 %v1040
    %1206 = vmatmul.bf16.gmra.mxu0 %v602
    %v1207 = vpop.f32.mrf.mxu0
    %v1208 = vadd.f32 %v1195, %v1207
    %v1209 = vpop.f32.mrf.mxu0
    %1210 = vdwg.mxu0
    %1211 = vmatpush.bf16.msra.mxu0 %v1055
    %1212 = vmatpush.bf16.msra.mxu0 %v1054
    %1213 = vmatpush.bf16.msra.mxu0 %v1053
    %1214 = vmatpush.bf16.msra.mxu0 %v1052
    %1215 = vmatpush.bf16.msra.mxu0 %v1051
    %1216 = vmatpush.bf16.msra.mxu0 %v1050
    %1217 = vmatpush.bf16.msra.mxu0 %v1049
    %1218 = vmatpush.bf16.msra.mxu0 %v1048
    %1219 = vmatmul.bf16.gmra.mxu0 %v603
    %v1220 = vpop.f32.mrf.mxu0
    %v1221 = vadd.f32 %v1208, %v1220
    %v1222 = vpop.f32.mrf.mxu0
    %1223 = vdwg.mxu0
    %v1224 = vlaneseq
    %v1225 = vand.u32 %v1224, 127
    %vm1226 = vcmp.lt.s32.totalorder %v1225, 9
    %v1227 = vsel %vm1226, %v1221, -1e+30
    %1228 = vmax.xlane.f32.xlu0 %v1227
    %v1229 = vpop.xlane.xlu0 %1228
    %v1230 = vsub.f32 %v1227, %v1229
    %v1231 = vmul.f32 %v1230, 1.442695
    %v1232 = vpow.pop %v1231
    %1233 = vadd.xlane.f32.xlu0 %v1232
    %v1234 = vpop.xlane.xlu0 %1233
    %v1235 = vrcp.pop %v1234
    %v1236 = vmul.f32 %v1234, %v1235
    %v1237 = vsub.f32 1.0, %v1236
    %v1238 = vmul.f32 %v1235, %v1237
    %v1239 = vadd.f32 %v1235, %v1238
    %vm1240 = vweird.f32 %v1234
    %vm1241 = vweird.f32 %v1235
    %vm1242 = vmor %vm1240, %vm1241
    %v1243 = vsel %vm1242, %v1235, %v1239
    %v1244 = vand.u32 2147483647, %v1234
    %vm1245 = vcmp.eq.f32.partialorder %v1244, 8.507059e+37
    %v1246 = vand.u32 %v1234, 2147483648
    %v1247 = vor.u32 1.1754944e-38, %v1246
    %v1248 = vsel %vm1245, %v1247, %v1243
    %v1249 = vmul.f32 %v1232, %v1248
    %1250 = vst [vmem:[#allocation10] sm:$0xff] %v1249
    // Predicated region
    $region38: #{tpu_custom_call.1} parent=1 // pred_check
      _
    $region39: #{tpu_custom_call.1} parent=1 // pred_check_branch
      %1252 = sbr.rel (0) target = $region41
    $region40: #{tpu_custom_call.1} parent=1 // pred_region
      %1254 = vsyncadd [#allocation4], 0
      %s1256 = sshll.u32 [#allocation10], 4
      %s1257 = int_to_ptr.vmem [resolvable:$true] %s1256
      %s1258 = sshll.u32 %s5, 4
      %s1259 = int_to_ptr.hbm [resolvable:$true] %s1258
      %1261 = dma.vmem_to_hbm [thread:$0]  %s1257, 128, %s1259, [#allocation4]
    $region41: #{tpu_custom_call.1} parent=1 // pred_fallthru
      _
    // Predicated region
    $region42: #{tpu_custom_call.1} parent=1 // pred_check
      _
    $region43: #{tpu_custom_call.1} parent=1 // pred_check_branch
      %1263 = sbr.rel (0) target = $region45
    $region44: #{tpu_custom_call.1} parent=1 // pred_region
      %1265 = dma.done [#allocation4], 128
    $region45: #{tpu_custom_call.1} parent=1 // pred_fallthru
      _
    %1266 = vsyncpa [#allocation3], 1
    %1267 = vsyncpa [#allocation6], 1
    %1268 = vsyncpa [#allocation9], 1
    %1269 = vsyncpa [#allocation4], 1

</llo_original>
